<compile_context>
chip_gen: v7x
topology: tpu7x:2x2x1
jax: 0.10.0
libtpu: 0.0.40
codegen_flags: <defaults>
</compile_context>

<pallas_src>
import functools

import jax
import jax.numpy as jnp
from jax import lax
from jax.experimental import pallas as pl
from jax.experimental.pallas import tpu as pltpu


def _round_up(x, m):
    return ((x + m - 1) // m) * m


def _build_patches(x_ref, t0, tl, k, mm_dtype):
    """In-kernel im2col: assemble the (TL, K*C_in) patch tile from K shifted slices."""
    slices = [x_ref[0, pl.ds(t0 + kk, tl), :] for kk in range(k)]
    return jnp.concatenate(slices, axis=1).astype(mm_dtype)


def _stats_kernel(x_ref, w_ref, stats_ref, *, tl, k, l_out, l_out_pad, mm_dtype):
    # x_ref:     (1, L_pad, C_in)  VMEM (full sample, channels-last, zero-padded on time)
    # w_ref:     (K*C_in, C_out)   VMEM (flattened conv weight, resident across the grid)
    # stats_ref: (2, C_out)        VMEM output-resident accumulator: [sum; sum_of_squares]
    ni = pl.program_id(0)
    ti = pl.program_id(1)

    @pl.when(jnp.logical_and(ni == 0, ti == 0))
    def _init():
        stats_ref[...] = jnp.zeros_like(stats_ref)

    t0 = pl.multiple_of(ti * tl, tl)
    patches = _build_patches(x_ref, t0, tl, k, mm_dtype)
    acc = jnp.dot(patches, w_ref[...], preferred_element_type=jnp.float32)  # (TL, C_out) f32

    if l_out_pad != l_out:
        # Exclude zero-padded time rows from the batch statistics (divisor is the true M).
        row = lax.broadcasted_iota(jnp.int32, (tl, 1), 0)
        acc = jnp.where(t0 + row < l_out, acc, 0.0)

    s1 = jnp.sum(acc, axis=0, keepdims=True)         # (1, C_out)
    s2 = jnp.sum(acc * acc, axis=0, keepdims=True)   # (1, C_out)
    stats_ref[...] = stats_ref[...] + jnp.concatenate([s1, s2], axis=0)


def _norm_kernel(x_ref, w_ref, ss_ref, o_ref, *, tl, k, mm_dtype):
    # ss_ref: (2, C_out) f32 = [scale; shift] precomputed from the global batch statistics.
    # o_ref:  (1, TL, C_out) lane-dense (C_out = 128) output tile.
    t0 = pl.multiple_of(pl.program_id(1) * tl, tl)
    patches = _build_patches(x_ref, t0, tl, k, mm_dtype)
    acc = jnp.dot(patches, w_ref[...], preferred_element_type=jnp.float32)  # (TL, C_out) f32
    scale = ss_ref[0:1, :]                                                  # (1, C_out)
    shift = ss_ref[1:2, :]                                                  # (1, C_out)
    y = jnp.maximum(acc * scale + shift, 0.0)
    o_ref[0, :, :] = y.astype(o_ref.dtype)


def block_fcn_conv(x, weight, bias, gamma, beta, *, eps=0.001, use_bf16=True,
                   out_dtype=jnp.float32, channels_last_out=True,
                   x_channels_last=False, tile_l=512):
    """Forward of BlockFCNConv with training-mode BatchNorm semantics.

    x:      (N, C_in, L) PyTorch NCL layout, or (N, L, C_in) if x_channels_last=True
    weight: (C_out, C_in, K)   PyTorch Conv1d layout
    bias:   (C_out,)  accepted for parity; cancels exactly under training-mode BN mean subtraction
    gamma, beta: (C_out,)      BatchNorm1d affine parameters
    returns (N, L_out, C_out) if channels_last_out else (N, C_out, L_out); L_out = L - K + 1
    """
    del bias
    # TODO(synk): eval-mode BatchNorm (running stats + momentum update) is stateful and not
    # implemented here; in that mode the conv bias would no longer cancel.

    x_nlc = x if x_channels_last else jnp.transpose(x, (0, 2, 1))   # (N, L, C_in) - cheap side
    n, l, c_in = x_nlc.shape
    c_out, c_in_w, k = weight.shape
    assert c_in == c_in_w
    l_out = l - k + 1
    assert l_out >= 1
    m_true = n * l_out
    kc = k * c_in
    mm_dtype = jnp.bfloat16 if use_bf16 else jnp.float32

    # Time-axis tile: large tiles amortize the ~0.35us/grid-step overhead (512+ rows ~ 85% of the
    # HBM roofline); multiple of 16 keeps f32/bf16 sublane packing valid. For realistic shapes
    # pick tile_l so that l_out % tile == 0 to avoid the final wrapper slice.
    tl = min(_round_up(max(tile_l, 16), 16), _round_up(l_out, 16))
    num_t = pl.cdiv(l_out, tl)
    l_out_pad = num_t * tl
    l_pad = l_out_pad + k - 1
    if l_pad > l:
        x_nlc = jnp.pad(x_nlc, ((0, 0), (0, l_pad - l), (0, 0)))
    x_f32 = x_nlc.astype(jnp.float32)

    # Flattened weight: w_flat[kk*C_in + i, o] = weight[o, i, kk]  (matches in-kernel patch layout).
    w_flat = jnp.transpose(weight, (2, 1, 0)).reshape(kc, c_out).astype(mm_dtype)

    x_spec = pl.BlockSpec((1, l_pad, c_in), lambda ni, ti: (ni, 0, 0))   # resident per sample
    w_spec = pl.BlockSpec((kc, c_out), lambda ni, ti: (0, 0))            # resident across grid
    ss_spec = pl.BlockSpec((2, c_out), lambda ni, ti: (0, 0))

    mm_flops = 2 * m_true * kc * c_out
    x_bytes = n * l_pad * c_in * 4
    w_bytes = kc * c_out * (2 if use_bf16 else 4)
    out_bytes = n * l_out_pad * c_out * jnp.dtype(out_dtype).itemsize

    # ---- Pass 1: global batch statistics (sum / sum-of-squares of the conv output) ----
    stats = pl.pallas_call(
        functools.partial(_stats_kernel, tl=tl, k=k, l_out=l_out,
                          l_out_pad=l_out_pad, mm_dtype=mm_dtype),
        out_shape=jax.ShapeDtypeStruct((2, c_out), jnp.float32),
        grid_spec=pltpu.PrefetchScalarGridSpec(
            num_scalar_prefetch=0,
            grid=(n, num_t),
            in_specs=[x_spec, w_spec],
            out_specs=pl.BlockSpec((2, c_out), lambda ni, ti: (0, 0)),
        ),
        compiler_params=pltpu.CompilerParams(
            dimension_semantics=("arbitrary", "arbitrary")),
        cost_estimate=pl.CostEstimate(
            flops=mm_flops + 4 * m_true * c_out, transcendentals=0,
            bytes_accessed=x_bytes + w_bytes + 2 * c_out * 4),
    )(x_f32, w_flat)

    # Tiny (C_out,)-wide glue: fold BN into one per-channel scale/shift FMA.
    mean = stats[0] / m_true
    var = jnp.maximum(stats[1] / m_true - mean * mean, 0.0)
    inv_std = lax.rsqrt(var + eps)
    scale = gamma.astype(jnp.float32) * inv_std
    shift = beta.astype(jnp.float32) - mean * scale
    ss = jnp.stack([scale, shift], axis=0)                               # (2, C_out) f32

    # ---- Pass 2: recompute conv per tile, fused scale/shift + ReLU, lane-dense store ----
    out_pad = pl.pallas_call(
        functools.partial(_norm_kernel, tl=tl, k=k, mm_dtype=mm_dtype),
        out_shape=jax.ShapeDtypeStruct((n, l_out_pad, c_out), out_dtype),
        grid_spec=pltpu.PrefetchScalarGridSpec(
            num_scalar_prefetch=0,
            grid=(n, num_t),
            in_specs=[x_spec, w_spec, ss_spec],
            out_specs=pl.BlockSpec((1, tl, c_out), lambda ni, ti: (ni, ti, 0)),
        ),
        compiler_params=pltpu.CompilerParams(
            dimension_semantics=("parallel", "parallel")),
        cost_estimate=pl.CostEstimate(
            flops=mm_flops + 3 * m_true * c_out, transcendentals=0,
            bytes_accessed=x_bytes + w_bytes + 2 * c_out * 4 + out_bytes),
    )(x_f32, w_flat, ss)

    out = out_pad if l_out_pad == l_out else out_pad[:, :l_out, :]
    if not channels_last_out:
        # Full-output transpose back to PyTorch NCL; avoid in perf-critical paths by keeping the
        # surrounding model channels-last (the kernel's native output layout).
        out = jnp.transpose(out, (0, 2, 1))
    return out


def _reference(x_ncl, weight, bias, gamma, beta, eps=0.001):
    # Pure-JAX reference mirroring PyTorch semantics (conv with bias, training-mode BN, ReLU).
    conv = lax.conv_general_dilated(
        x_ncl.astype(jnp.float32), weight.astype(jnp.float32),
        window_strides=(1,), padding="VALID",
        dimension_numbers=("NCH", "OIH", "NCH"))
    conv = conv + bias[None, :, None]
    mean = jnp.mean(conv, axis=(0, 2), keepdims=True)
    var = jnp.mean((conv - mean) ** 2, axis=(0, 2), keepdims=True)
    y = (conv - mean) / jnp.sqrt(var + eps)
    y = y * gamma[None, :, None] + beta[None, :, None]
    return jnp.maximum(y, 0.0)


if __name__ == "__main__":
    key = jax.random.PRNGKey(0)
    k_x, k_w, k_b, k_g, k_beta = jax.random.split(key, 5)

    # Shapes consistent with BlockFCNConv(in_channel=4, out_channel=128, kernel_size=8)
    N, C_IN, L = 2, 4, 16
    C_OUT, K = 128, 8
    L_OUT = L - K + 1

    x = jax.random.normal(k_x, (N, C_IN, L), dtype=jnp.float32)

    fan_in = C_IN * K
    bound = 1.0 / jnp.sqrt(fan_in)
    weight = jax.random.uniform(k_w, (C_OUT, C_IN, K), minval=-bound, maxval=bound)
    bias = jax.random.uniform(k_b, (C_OUT,), minval=-bound, maxval=bound)
    gamma = 1.0 + 0.1 * jax.random.normal(k_g, (C_OUT,))
    beta = 0.1 * jax.random.normal(k_beta, (C_OUT,))

    ref_ncl = _reference(x, weight, bias, gamma, beta, eps=0.001)          # (N, C_out, L_out)
    ref_nlc = jnp.transpose(ref_ncl, (0, 2, 1))                            # (N, L_out, C_out)

    # f32 matmul path, native channels-last output: tight check against the reference.
    out_f32 = jax.block_until_ready(
        block_fcn_conv(x, weight, bias, gamma, beta, eps=0.001, use_bf16=False))
    assert out_f32.shape == (N, L_OUT, C_OUT)
    assert float(jnp.max(jnp.abs(out_f32 - ref_nlc))) < 1e-4

    # NCL interface-parity path (wrapper transpose) — layout check only.
    out_ncl = jax.block_until_ready(
        block_fcn_conv(x, weight, bias, gamma, beta, eps=0.001, use_bf16=False,
                       channels_last_out=False))
    assert out_ncl.shape == (N, C_OUT, L_OUT)
    assert float(jnp.max(jnp.abs(out_ncl - ref_ncl))) < 1e-4

    # bf16 matmul path (default, MXU-native): looser tolerance from operand rounding.
    out_bf16 = jax.block_until_ready(
        block_fcn_conv(x, weight, bias, gamma, beta, eps=0.001, use_bf16=True))
    assert out_bf16.shape == (N, L_OUT, C_OUT)
    assert float(jnp.max(jnp.abs(out_bf16 - ref_nlc))) < 1e-1

    print("KERNEL_OK")
</pallas_src>

<mosaic_0001>
module attributes {stable_mosaic.version = 11 : i64} {
  func.func @_stats_kernel(%arg0: i32, %arg1: i32, %arg2: memref<1x23x4xf32, #tpu.memory_space<vmem>>, %arg3: memref<32x128xf32, #tpu.memory_space<vmem>>, %arg4: memref<2x128xf32, #tpu.memory_space<vmem>>) attributes {dimension_semantics = [#tpu.dimension_semantics<arbitrary>, #tpu.dimension_semantics<arbitrary>], iteration_bounds = array<i64: 2, 1>, scalar_prefetch = 0 : i64, scratch_operands = 0 : i64, tpu.core_type = #tpu.core_type<tc>, window_params = [{transform_indices = @transform_0, window_bounds = array<i64: 1, 23, 4>}, {pipeline_mode = #tpu.pipeline_mode<synchronous>, transform_indices = @transform_1, window_bounds = array<i64: 32, 128>}, {pipeline_mode = #tpu.pipeline_mode<synchronous>, transform_indices = @transform_2, window_bounds = array<i64: 2, 128>}]} {
    %c0_i32 = arith.constant 0 : i32
    %0 = arith.cmpi eq, %arg0, %c0_i32 : i32
    %c0_i32_0 = arith.constant 0 : i32
    %1 = arith.cmpi eq, %arg1, %c0_i32_0 : i32
    %2 = arith.andi %0, %1 : i1
    %3 = arith.extui %2 : i1 to i32
    %c0_i32_1 = arith.constant 0 : i32
    %4 = arith.cmpi ne, %3, %c0_i32_1 : i32
    scf.if %4 {
      %cst_27 = arith.constant 0.000000e+00 : f32
      %60 = vector.broadcast %cst_27 : f32 to vector<2x128xf32>
      %c0_28 = arith.constant 0 : index
      %c0_29 = arith.constant 0 : index
      %61 = vector.load %arg4[%c0_28, %c0_29] : memref<2x128xf32, #tpu.memory_space<vmem>>, vector<2x128xf32>
      tpu.vector_store %arg4[%c0_28, %c0_29], %60 {strides = array<i32>} : memref<2x128xf32, #tpu.memory_space<vmem>>, vector<2x128xf32>,
    } else {
    }
    %c16_i32 = arith.constant 16 : i32
    %5 = arith.muli %arg1, %c16_i32 : i32
    %6 = tpu.assume_multiple %5, 16 : i32
    %c0_i32_2 = arith.constant 0 : i32
    %7 = arith.addi %6, %c0_i32_2 : i32
    %c0 = arith.constant 0 : index
    %8 = arith.index_cast %7 : i32 to index
    %c0_3 = arith.constant 0 : index
    %9 = vector.load %arg2[%c0, %8, %c0_3] : memref<1x23x4xf32, #tpu.memory_space<vmem>>, vector<1x16x4xf32>
    %10 = vector.shape_cast %9 : vector<1x16x4xf32> to vector<16x4xf32>
    %c1_i32 = arith.constant 1 : i32
    %11 = arith.addi %6, %c1_i32 : i32
    %c0_4 = arith.constant 0 : index
    %12 = arith.index_cast %11 : i32 to index
    %c0_5 = arith.constant 0 : index
    %13 = vector.load %arg2[%c0_4, %12, %c0_5] : memref<1x23x4xf32, #tpu.memory_space<vmem>>, vector<1x16x4xf32>
    %14 = vector.shape_cast %13 : vector<1x16x4xf32> to vector<16x4xf32>
    %c2_i32 = arith.constant 2 : i32
    %15 = arith.addi %6, %c2_i32 : i32
    %c0_6 = arith.constant 0 : index
    %16 = arith.index_cast %15 : i32 to index
    %c0_7 = arith.constant 0 : index
    %17 = vector.load %arg2[%c0_6, %16, %c0_7] : memref<1x23x4xf32, #tpu.memory_space<vmem>>, vector<1x16x4xf32>
    %18 = vector.shape_cast %17 : vector<1x16x4xf32> to vector<16x4xf32>
    %c3_i32 = arith.constant 3 : i32
    %19 = arith.addi %6, %c3_i32 : i32
    %c0_8 = arith.constant 0 : index
    %20 = arith.index_cast %19 : i32 to index
    %c0_9 = arith.constant 0 : index
    %21 = vector.load %arg2[%c0_8, %20, %c0_9] : memref<1x23x4xf32, #tpu.memory_space<vmem>>, vector<1x16x4xf32>
    %22 = vector.shape_cast %21 : vector<1x16x4xf32> to vector<16x4xf32>
    %c4_i32 = arith.constant 4 : i32
    %23 = arith.addi %6, %c4_i32 : i32
    %c0_10 = arith.constant 0 : index
    %24 = arith.index_cast %23 : i32 to index
    %c0_11 = arith.constant 0 : index
    %25 = vector.load %arg2[%c0_10, %24, %c0_11] : memref<1x23x4xf32, #tpu.memory_space<vmem>>, vector<1x16x4xf32>
    %26 = vector.shape_cast %25 : vector<1x16x4xf32> to vector<16x4xf32>
    %c5_i32 = arith.constant 5 : i32
    %27 = arith.addi %6, %c5_i32 : i32
    %c0_12 = arith.constant 0 : index
    %28 = arith.index_cast %27 : i32 to index
    %c0_13 = arith.constant 0 : index
    %29 = vector.load %arg2[%c0_12, %28, %c0_13] : memref<1x23x4xf32, #tpu.memory_space<vmem>>, vector<1x16x4xf32>
    %30 = vector.shape_cast %29 : vector<1x16x4xf32> to vector<16x4xf32>
    %c6_i32 = arith.constant 6 : i32
    %31 = arith.addi %6, %c6_i32 : i32
    %c0_14 = arith.constant 0 : index
    %32 = arith.index_cast %31 : i32 to index
    %c0_15 = arith.constant 0 : index
    %33 = vector.load %arg2[%c0_14, %32, %c0_15] : memref<1x23x4xf32, #tpu.memory_space<vmem>>, vector<1x16x4xf32>
    %34 = vector.shape_cast %33 : vector<1x16x4xf32> to vector<16x4xf32>
    %c7_i32 = arith.constant 7 : i32
    %35 = arith.addi %6, %c7_i32 : i32
    %c0_16 = arith.constant 0 : index
    %36 = arith.index_cast %35 : i32 to index
    %c0_17 = arith.constant 0 : index
    %37 = vector.load %arg2[%c0_16, %36, %c0_17] : memref<1x23x4xf32, #tpu.memory_space<vmem>>, vector<1x16x4xf32>
    %38 = vector.shape_cast %37 : vector<1x16x4xf32> to vector<16x4xf32>
    %39 = tpu.concatenate %10, %14, %18, %22, %26, %30, %34, %38 in 1 : vector<16x4xf32>, vector<16x4xf32>, vector<16x4xf32>, vector<16x4xf32>, vector<16x4xf32>, vector<16x4xf32>, vector<16x4xf32>, vector<16x4xf32> -> vector<16x32xf32>
    %c0_18 = arith.constant 0 : index
    %c0_19 = arith.constant 0 : index
    %40 = vector.load %arg3[%c0_18, %c0_19] : memref<32x128xf32, #tpu.memory_space<vmem>>, vector<32x128xf32>
    %cst = arith.constant dense<0.000000e+00> : vector<16x128xf32>
    %41 = tpu.matmul %39, %40, %cst {dimension_numbers = #tpu.dot_dimension_numbers<[1], [0], [0], [1], [0, 0, 1, 1], [], []>} : vector<16x32xf32>, vector<32x128xf32>, vector<16x128xf32> -> vector<16x128xf32>
    %42 = tpu.iota {dimensions = array<i32: 0>} : vector<16x1xi32>
    %43 = vector.broadcast %6 : i32 to vector<16x1xi32>
    %44 = arith.addi %43, %42 : vector<16x1xi32>
    %c9_i32 = arith.constant 9 : i32
    %45 = vector.broadcast %c9_i32 : i32 to vector<16x1xi32>
    %46 = arith.cmpi slt, %44, %45 : vector<16x1xi32>
    %cst_20 = arith.constant 0.000000e+00 : f32
    %47 = vector.shape_cast %46 : vector<16x1xi1> to vector<16x1xi1>
    %48 = vector.broadcast %47 : vector<16x1xi1> to vector<16x128xi1>
    %49 = vector.broadcast %cst_20 : f32 to vector<16x128xf32>
    %50 = arith.select %48, %41, %49 : vector<16x128xi1>, vector<16x128xf32>
    %cst_21 = arith.constant dense<0.000000e+00> : vector<128xf32>
    %51 = vector.multi_reduction <add>, %50, %cst_21 [0] : vector<16x128xf32> to vector<128xf32>
    %52 = vector.shape_cast %51 : vector<128xf32> to vector<1x128xf32>
    %53 = arith.mulf %50, %50 : vector<16x128xf32>
    %cst_22 = arith.constant dense<0.000000e+00> : vector<128xf32>
    %54 = vector.multi_reduction <add>, %53, %cst_22 [0] : vector<16x128xf32> to vector<128xf32>
    %55 = vector.shape_cast %54 : vector<128xf32> to vector<1x128xf32>
    %c0_23 = arith.constant 0 : index
    %c0_24 = arith.constant 0 : index
    %56 = vector.load %arg4[%c0_23, %c0_24] : memref<2x128xf32, #tpu.memory_space<vmem>>, vector<2x128xf32>
    %57 = tpu.concatenate %52, %55 in 0 : vector<1x128xf32>, vector<1x128xf32> -> vector<2x128xf32>
    %58 = arith.addf %56, %57 : vector<2x128xf32>
    %c0_25 = arith.constant 0 : index
    %c0_26 = arith.constant 0 : index
    %59 = vector.load %arg4[%c0_25, %c0_26] : memref<2x128xf32, #tpu.memory_space<vmem>>, vector<2x128xf32>
    tpu.vector_store %arg4[%c0_25, %c0_26], %58 {strides = array<i32>} : memref<2x128xf32, #tpu.memory_space<vmem>>, vector<2x128xf32>,
    return
  }
  func.func @transform_0(%arg0: i32, %arg1: i32) -> (i32, i32, i32) {
    %c0_i32 = arith.constant 0 : i32
    %c0_i32_0 = arith.constant 0 : i32
    %c0_i32_1 = arith.constant 0 : i32
    return %arg0, %c0_i32, %c0_i32_0 : i32, i32, i32
  }
  func.func @transform_1(%arg0: i32, %arg1: i32) -> (i32, i32) {
    %c0_i32 = arith.constant 0 : i32
    %c0_i32_0 = arith.constant 0 : i32
    %c0_i32_1 = arith.constant 0 : i32
    return %c0_i32, %c0_i32_0 : i32, i32
  }
  func.func @transform_2(%arg0: i32, %arg1: i32) -> (i32, i32) {
    %c0_i32 = arith.constant 0 : i32
    %c0_i32_0 = arith.constant 0 : i32
    %c0_i32_1 = arith.constant 0 : i32
    return %c0_i32, %c0_i32_0 : i32, i32
  }
}

</mosaic_0001>

<llo_original>
// kernel: tpu_custom_call.1
$region0: #{tpu_custom_call.1}
  #allocation0 [shape = 'u32[]', space=smem, size = 0x4, offset = 0x4, fixed_abs, tag = 'smem constant byte address 0x4 - core index']
  #allocation1 [shape = 'u32[144,128]{1,0:T(1,128)}', space=vmem, size = 0x12000, scoped, tag = 'internal scratch']
  %s0 = inlined_call_operand.vmem [shape: f32[2,23,4], index: 0, kind: input, shape index: {}]
  %s1 = inlined_call_operand.vmem [shape: f32[32,128], index: 1, kind: input, shape index: {}]
  %s2 = inlined_call_operand.hbm [shape: f32[2,128], index: 2, kind: output, shape index: {}]
  %s3 = sld [smem:[#allocation0]]
  $region45: #{tpu_custom_call.1} parent=0
    _
  %s5 = ssub.s32 1, %s3
  %s6 = scalar_select 0, %s5, %s3
  $region1: #{tpu_custom_call.1} parent=0
    #allocation2 [shape = 'u8[1024]{0}', space=vmem, size = 0x400, scoped, tag = 'output window, operand 0, single buffered']
    #allocation3 [shape = 's32[2]{0}', space=sflag, size = 0x8, scoped, tag = 'scoped memory for tpu_custom_call.1']
    %7 = vsyncpa [#allocation3], 0
    loop: start=0, step=1, limit=4
    $region2: #{tpu_custom_call.1} parent=1 // loop_pre_header
      _
    $region3: #{tpu_custom_call.1} parent=1 // loop_header
      %s9 = sphi 0, %s13
      %p10 = scmp.ge.s32.totalorder %s9, 4
      %s16 = sphi 0, %s28
      %s17 = sphi 0, %s24
      %s18 = sphi 0, %s16
      %s19 = sphi 0, %s17
      %s20 = sphi 0, %s18
      %s21 = sphi 0, %s19
      %s31 = sphi 0, %s33
      %s34 = sphi 0, %s31
      %s35 = sphi 0, %s34
      %s51 = sphi 0, %s35
      %s55 = sphi 0, %s55
      %s57 = sphi 0, %s55
      %s58 = sphi 0, %s57
      %s72 = sphi 0, %s58
      %s76 = sphi 0, %s76
      %s78 = sphi 0, %s76
      %s79 = sphi 0, %s78
      %s93 = sphi 0, %s79
    $region4: #{tpu_custom_call.1} parent=1 // loop_header_branch
      %12 = sbr.rel (%p10) target = $region8
    $region5: #{tpu_custom_call.1} parent=1 // loop_body
      %s14 = ssub.s32 %s9, 1
      %s15 = ssub.s32 %s9, 2
      %s22 = sadd.s32 1, %s17
      %p23 = scmp.ge.s32.totalorder %s22, 1
      %s24 = scalar_select %p23, 0, %s22
      %s25 = sadd.s32 1, %s16
      %s26 = scalar_select %p23, %s25, %s16
      %p27 = scmp.ge.s32.totalorder %s26, 2
      %s28 = scalar_select %p27, 0, %s26
      %s29 = ssub.s32 %s16, %s28
      %p30 = scmp.eq.s32.totalorder %s29, 0
      %s32 = sadd.s32 %s31, 1
      %s33 = scalar_select %p30, %s31, %s32
      %p36 = pneg %p30
      %p37 = scmp.eq.s32.totalorder %s9, 1
      %p38 = por %p36, %p37
      %p39 = scmp.ne.s32.totalorder %s31, %s34
      %p40 = scmp.eq.s32.totalorder %s9, 0
      %p41 = por %p39, %p40
      %p42 = scmp.ne.s32.totalorder %s31, %s34
      %p43 = scmp.eq.s32.totalorder %s14, 1
      %p44 = por %p42, %p43
      %p45 = scmp.ne.s32.totalorder %s34, %s35
      %p46 = scmp.eq.s32.totalorder %s14, 0
      %p47 = por %p45, %p46
      %p48 = scmp.ne.s32.totalorder %s34, %s35
      %p49 = scmp.eq.s32.totalorder %s15, 1
      %p50 = por %p48, %p49
      %p52 = scmp.ne.s32.totalorder %s35, %s51
      %p53 = scmp.eq.s32.totalorder %s15, 0
      %p54 = por %p52, %p53
      %s56 = sadd.s32 %s55, 1
      %p59 = scmp.eq.s32.totalorder %s9, 1
      %p60 = scmp.ne.s32.totalorder %s55, %s57
      %p61 = scmp.eq.s32.totalorder %s9, 0
      %p62 = por %p60, %p61
      %p63 = scmp.ne.s32.totalorder %s55, %s57
      %p64 = scmp.eq.s32.totalorder %s14, 1
      %p65 = por %p63, %p64
      %p66 = scmp.ne.s32.totalorder %s57, %s58
      %p67 = scmp.eq.s32.totalorder %s14, 0
      %p68 = por %p66, %p67
      %p69 = scmp.ne.s32.totalorder %s57, %s58
      %p70 = scmp.eq.s32.totalorder %s15, 1
      %p71 = por %p69, %p70
      %p73 = scmp.ne.s32.totalorder %s58, %s72
      %p74 = scmp.eq.s32.totalorder %s15, 0
      %p75 = por %p73, %p74
      %s77 = sadd.s32 %s76, 1
      %p80 = scmp.eq.s32.totalorder %s9, 1
      %p81 = scmp.ne.s32.totalorder %s76, %s78
      %p82 = scmp.eq.s32.totalorder %s9, 0
      %p83 = por %p81, %p82
      %p84 = scmp.ne.s32.totalorder %s76, %s78
      %p85 = scmp.eq.s32.totalorder %s14, 1
      %p86 = por %p84, %p85
      %p87 = scmp.ne.s32.totalorder %s78, %s79
      %p88 = scmp.eq.s32.totalorder %s14, 0
      %p89 = por %p87, %p88
      %p90 = scmp.ne.s32.totalorder %s78, %s79
      %p91 = scmp.eq.s32.totalorder %s15, 1
      %p92 = por %p90, %p91
      %p94 = scmp.ne.s32.totalorder %s79, %s93
      %p95 = scmp.eq.s32.totalorder %s15, 0
      %p96 = por %p94, %p95
      %p97 = scmp.le.s32.totalorder 1, %s9
      %p98 = scmp.lt.s32.totalorder %s9, 3
      %p99 = pnand %p97, %p98
      %p100 = pneg %p99
      // Predicated region
      $region9: #{tpu_custom_call.1} parent=5 // pred_check
        _
      $region10: #{tpu_custom_call.1} parent=5 // pred_check_branch
        %102 = sbr.rel (%p99) target = $region12
      $region11: #{tpu_custom_call.1} parent=5 // pred_region
        %s103 = ssub.s32 %s9, 1
        // Predicated region
        $region13: #{tpu_custom_call.1} parent=11 // pred_check
          %p104 = pneg %p68
        $region14: #{tpu_custom_call.1} parent=11 // pred_check_branch
          %106 = sbr.rel (%p104) target = $region16
        $region15: #{tpu_custom_call.1} parent=11 // pred_region
          _
        $region16: #{tpu_custom_call.1} parent=11 // pred_fallthru
          _
      $region12: #{tpu_custom_call.1} parent=5 // pred_fallthru
        _
      %p107 = scmp.lt.s32.totalorder %s9, 2
      // Predicated region
      $region17: #{tpu_custom_call.1} parent=5 // pred_check
        %p108 = pneg %p107
      $region18: #{tpu_custom_call.1} parent=5 // pred_check_branch
        %110 = sbr.rel (%p108) target = $region20
      $region19: #{tpu_custom_call.1} parent=5 // pred_region
        // Predicated region
        $region21: #{tpu_custom_call.1} parent=19 // pred_check
          %p111 = pneg %p41
        $region22: #{tpu_custom_call.1} parent=19 // pred_check_branch
          %113 = sbr.rel (%p111) target = $region24
        $region23: #{tpu_custom_call.1} parent=19 // pred_region
          %p114 = scmp.lt.s32.totalorder %s16, 1
          %s115 = scalar_select %p114, %s16, 1
          %s116 = smul.addr %s115, 3
          %s117 = smul.addr %s116, 8
          %s118 = scalar_lea.vmem %s0, %s117
        $region24: #{tpu_custom_call.1} parent=19 // pred_fallthru
          _
      $region20: #{tpu_custom_call.1} parent=5 // pred_fallthru
        _
      %p119 = scmp.le.s32.totalorder 1, %s9
      %p120 = scmp.lt.s32.totalorder %s9, 3
      %p121 = pnand %p119, %p120
      %p122 = pneg %p121
      // Predicated region
      $region25: #{tpu_custom_call.1} parent=5 // pred_check
        _
      $region26: #{tpu_custom_call.1} parent=5 // pred_check_branch
        %124 = sbr.rel (%p121) target = $region28
      $region27: #{tpu_custom_call.1} parent=5 // pred_region
        %s125 = ssub.s32 %s9, 1
        %p126 = scmp.lt.s32.totalorder %s18, 1
        %s127 = scalar_select %p126, %s18, 1
        %s128 = smul.addr %s127, 3
        %s129 = smul.addr %s128, 8
        %s130 = scalar_lea.vmem %s0, %s129
        %p131 = pneg %p47
        %p132 = pneg %p44
        %p133 = pneg %p68
        %p134 = pneg %p65
        %p135 = pneg %p89
        %p136 = pneg %p86
        %p137 = scmp.lt.s32.totalorder %s18, 1
        %s138 = scalar_select %p137, %s18, 1
        %s139 = smul.addr %s138, 3
        %s140 = smul.addr %s139, 8
        %s141 = scalar_lea.vmem %s0, %s140
        %p142 = scmp.eq.s32.totalorder %s18, 0
        %p143 = scmp.eq.s32.totalorder %s19, 0
        %p144 = pnand %p142, %p143
        %p145 = pneg %p144
        // Predicated region
        $region29: #{tpu_custom_call.1} parent=27 // pred_check
          _
        $region30: #{tpu_custom_call.1} parent=27 // pred_check_branch
          %147 = sbr.rel (%p144) target = $region32
        $region31: #{tpu_custom_call.1} parent=27 // pred_region
          %148 = vst [vmem:[#allocation2] sm:$0x3] 0.0
        $region32: #{tpu_custom_call.1} parent=27 // pred_fallthru
          _
        %s149 = smul.u32 %s19, 16
        %s150 = scalar_lea.vmem %s141, %s149
        %v151 = vld [vmem:[%s150] sm:$0xff]
        %v152 = vld [vmem:[%s150 + $0x8] sm:$0xff]
        %s153 = sadd.s32 %s149, 1
        %s154 = scalar_lea.vmem %s141, %s153
        %v155 = vld [vmem:[%s154] sm:$0xff]
        %v156 = vld [vmem:[%s154 + $0x8] sm:$0xff]
        %s157 = sadd.s32 %s149, 2
        %s158 = scalar_lea.vmem %s141, %s157
        %v159 = vld [vmem:[%s158] sm:$0xff]
        %v160 = vld [vmem:[%s158 + $0x8] sm:$0xff]
        %s161 = sadd.s32 %s149, 3
        %s162 = scalar_lea.vmem %s141, %s161
        %v163 = vld [vmem:[%s162] sm:$0xff]
        %v164 = vld [vmem:[%s162 + $0x8] sm:$0xff]
        %s165 = sadd.s32 %s149, 4
        %s166 = scalar_lea.vmem %s141, %s165
        %v167 = vld [vmem:[%s166] sm:$0xff]
        %v168 = vld [vmem:[%s166 + $0x8] sm:$0xff]
        %s169 = sadd.s32 %s149, 5
        %s170 = scalar_lea.vmem %s141, %s169
        %v171 = vld [vmem:[%s170] sm:$0xff]
        %v172 = vld [vmem:[%s170 + $0x8] sm:$0xff]
        %s173 = sadd.s32 %s149, 6
        %s174 = scalar_lea.vmem %s141, %s173
        %v175 = vld [vmem:[%s174] sm:$0xff]
        %v176 = vld [vmem:[%s174 + $0x8] sm:$0xff]
        %s177 = sadd.s32 %s149, 7
        %s178 = scalar_lea.vmem %s141, %s177
        %v179 = vld [vmem:[%s178] sm:$0xff]
        %v180 = vld [vmem:[%s178 + $0x8] sm:$0xff]
        %183 = vrot.lane.b32.xlu0 %v155, 4
        %v184 = vpop.permute.xlu0 %183
        %185 = vrot.lane.b32.xlu0 %v156, 4
        %v186 = vpop.permute.xlu0 %185
        %191 = vrot.lane.b32.xlu0 %v159, 8
        %v192 = vpop.permute.xlu0 %191
        %193 = vrot.lane.b32.xlu0 %v160, 8
        %v194 = vpop.permute.xlu0 %193
        %199 = vrot.lane.b32.xlu0 %v163, 12
        %v200 = vpop.permute.xlu0 %199
        %201 = vrot.lane.b32.xlu0 %v164, 12
        %v202 = vpop.permute.xlu0 %201
        %207 = vrot.lane.b32.xlu0 %v167, 16
        %v208 = vpop.permute.xlu0 %207
        %209 = vrot.lane.b32.xlu0 %v168, 16
        %v210 = vpop.permute.xlu0 %209
        %215 = vrot.lane.b32.xlu0 %v171, 20
        %v216 = vpop.permute.xlu0 %215
        %217 = vrot.lane.b32.xlu0 %v172, 20
        %v218 = vpop.permute.xlu0 %217
        %223 = vrot.lane.b32.xlu0 %v175, 24
        %v224 = vpop.permute.xlu0 %223
        %225 = vrot.lane.b32.xlu0 %v176, 24
        %v226 = vpop.permute.xlu0 %225
        %231 = vrot.lane.b32.xlu0 %v179, 28
        %v232 = vpop.permute.xlu0 %231
        %233 = vrot.lane.b32.xlu0 %v180, 28
        %v234 = vpop.permute.xlu0 %233
        %vm237 = vcmask 31744
        %v238 = vsel %vm237, %v151, %v184
        %v239 = vsel %vm237, %v152, %v186
        %vm240 = vcmask 64512
        %v241 = vsel %vm240, %v238, %v192
        %v242 = vsel %vm240, %v239, %v194
        %vm243 = vcmask 97280
        %v244 = vsel %vm243, %v241, %v200
        %v245 = vsel %vm243, %v242, %v202
        %vm246 = vcmask 130048
        %v247 = vsel %vm246, %v244, %v208
        %v248 = vsel %vm246, %v245, %v210
        %vm249 = vcmask 162816
        %v250 = vsel %vm249, %v247, %v216
        %v251 = vsel %vm249, %v248, %v218
        %vm252 = vcmask 195584
        %v253 = vsel %vm252, %v250, %v224
        %v254 = vsel %vm252, %v251, %v226
        %vm255 = vcmask 228352
        %v256 = vsel %vm255, %v253, %v232
        %v257 = vsel %vm255, %v254, %v234
        %v258 = vld [vmem:[%s1] sm:$0xff]
        %v259 = vld [vmem:[%s1 + $0x8] sm:$0xff]
        %v260 = vld [vmem:[%s1 + $0x10] sm:$0xff]
        %v261 = vld [vmem:[%s1 + $0x18] sm:$0xff]
        %vm262 = vcmask 261120
        %v264 = vsel %vm262, %v256, 0
        %v267 = vsel %vm262, %v257, 0
        %269 = vmatprep.subr.mxu0 0.0
        %270 = vmatpush1.msra.mxu0 %v258
        %271 = vmatprep.subr.mxu0 0.0
        %272 = vmatpush1.msra.mxu0 %v259
        %273 = vmatprep.subr.mxu0 0.0
        %274 = vmatpush1.msra.mxu0 %v260
        %275 = vmatprep.subr.mxu0 0.0
        %276 = vmatpush1.msra.mxu0 %v261
        %277 = vmatprep.subr.mxu0 0.0
        %278 = vmatpush1.msra.mxu0 0.0
        %279 = vmatprep.subr.mxu0 0.0
        %280 = vmatpush1.msra.mxu0 0.0
        %281 = vmatprep.subr.mxu0 0.0
        %282 = vmatpush1.msra.mxu0 0.0
        %283 = vmatprep.subr.mxu0 0.0
        %284 = vmatpush1.msra.mxu0 0.0
        %285 = vmatprep.subr.mxu0 0.0
        %286 = vmatpush1.msra.mxu0 0.0
        %287 = vmatprep.subr.mxu0 0.0
        %288 = vmatpush1.msra.mxu0 0.0
        %289 = vmatprep.subr.mxu0 0.0
        %290 = vmatpush1.msra.mxu0 0.0
        %291 = vmatprep.subr.mxu0 0.0
        %292 = vmatpush1.msra.mxu0 0.0
        %293 = vmatprep.subr.mxu0 0.0
        %294 = vmatpush1.msra.mxu0 0.0
        %295 = vmatprep.subr.mxu0 0.0
        %296 = vmatpush1.msra.mxu0 0.0
        %297 = vmatprep.subr.mxu0 0.0
        %298 = vmatpush1.msra.mxu0 0.0
        %299 = vmatprep.subr.mxu0 0.0
        %300 = vmatpush1.msra.mxu0 0.0
        %301 = vmatprep.subr.mxu0 0.0
        %302 = vmatpush1.msra.mxu0 0.0
        %303 = vmatprep.subr.mxu0 0.0
        %304 = vmatpush1.msra.mxu0 0.0
        %305 = vmatprep.subr.mxu0 0.0
        %306 = vmatpush1.msra.mxu0 0.0
        %307 = vmatprep.subr.mxu0 0.0
        %308 = vmatpush1.msra.mxu0 0.0
        %309 = vmatprep.subr.mxu0 0.0
        %310 = vmatpush1.msra.mxu0 0.0
        %311 = vmatprep.subr.mxu0 0.0
        %312 = vmatpush1.msra.mxu0 0.0
        %313 = vmatprep.subr.mxu0 0.0
        %314 = vmatpush1.msra.mxu0 0.0
        %315 = vmatprep.subr.mxu0 0.0
        %316 = vmatpush1.msra.mxu0 0.0
        %317 = vmatprep.subr.mxu0 0.0
        %318 = vmatpush1.msra.mxu0 0.0
        %319 = vmatprep.subr.mxu0 0.0
        %320 = vmatpush1.msra.mxu0 0.0
        %321 = vmatprep.subr.mxu0 0.0
        %322 = vmatpush1.msra.mxu0 0.0
        %323 = vmatprep.subr.mxu0 0.0
        %324 = vmatpush1.msra.mxu0 0.0
        %325 = vmatprep.subr.mxu0 0.0
        %326 = vmatpush1.msra.mxu0 0.0
        %327 = vmatprep.subr.mxu0 0.0
        %328 = vmatpush1.msra.mxu0 0.0
        %329 = vmatprep.subr.mxu0 0.0
        %330 = vmatpush1.msra.mxu0 0.0
        %331 = vmatprep.subr.mxu0 0.0
        %332 = vmatpush1.msra.mxu0 0.0
        %333 = vmatprep.mubr.f32.mxu0 0.0
        %334 = vmatmul.mubr.f32.gmra.mrb[0].mxu0 %v264
        %v335 = vpop.f32.mrb[0].mxu0
        %v336 = vadd.f32 0.0, %v335
        %v337 = vpop.f32.mrb[0].mxu0
        %338 = vmatprep.mubr.f32.mxu0 0.0
        %339 = vmatmul.mubr.f32.gmra.mrb[0].mxu0 %v267
        %v340 = vpop.f32.mrb[0].mxu0
        %v341 = vadd.f32 0.0, %v340
        %v342 = vpop.f32.mrb[0].mxu0
        %343 = vdwg.mxu0
        %v344 = vlaneseq
        %v345 = vshrl.u32 %v344, 7
        %v346 = vadd.s32 %v345, 8
        %v347 = vstv %s149
        %v348 = vadd.s32 %v347, %v345
        %v349 = vadd.s32 %v347, %v346
        %vm350 = vcmp.lt.s32.totalorder %v348, 9
        %vm351 = vcmp.lt.s32.totalorder %v349, 9
        %v352 = vsel %vm350, 1, 0
        %v353 = vsel %vm351, 1, 0
        %vm354 = vcmp.eq.s32.totalorder %v352, 1
        %vm355 = vcmp.eq.s32.totalorder %v353, 1
        %v356 = vsel %vm354, %v336, 0.0
        %v357 = vsel %vm355, %v341, 0.0
        %v358 = vadd.f32 %v356, %v357
        %v359 = vrot.slane %v358, 4
        %v360 = vadd.f32 %v358, %v359
        %v361 = vrot.slane %v360, 2
        %v362 = vadd.f32 %v360, %v361
        %v363 = vrot.slane %v362, 1
        %v364 = vadd.f32 %v362, %v363
        %v365 = vmul.f32 %v356, %v356
        %v366 = vmul.f32 %v357, %v357
        %v367 = vadd.f32 %v365, %v366
        %v368 = vrot.slane %v367, 4
        %v369 = vadd.f32 %v367, %v368
        %v370 = vrot.slane %v369, 2
        %v371 = vadd.f32 %v369, %v370
        %v372 = vrot.slane %v371, 1
        %v373 = vadd.f32 %v371, %v372
        %v374 = vld [vmem:[#allocation2] sm:$0x3]
        %vm375 = vcmask 1040384
        %v376 = vsel %vm375, %v364, %v373
        %v377 = vadd.f32 %v374, %v376
        %378 = vst [vmem:[#allocation2] sm:$0x3] %v377
        // Predicated region
        $region33: #{tpu_custom_call.1} parent=27 // pred_check
          %p379 = pneg %p86
        $region34: #{tpu_custom_call.1} parent=27 // pred_check_branch
          %381 = sbr.rel (%p379) target = $region36
        $region35: #{tpu_custom_call.1} parent=27 // pred_region
          %s383 = ssub.s32 32, 32
          %384 = vsyncadd [#allocation3], %s383
          %s386 = sshll.u32 [#allocation2], 4
          %s387 = int_to_ptr.vmem [resolvable:$true] %s386
          %389 = dma.vmem_to_hbm [thread:$0]  %s387, 32, %s2, [#allocation3]
        $region36: #{tpu_custom_call.1} parent=27 // pred_fallthru
          _
        // Predicated region
        $region37: #{tpu_custom_call.1} parent=27 // pred_check
          %p390 = pneg %p86
        $region38: #{tpu_custom_call.1} parent=27 // pred_check_branch
          %392 = sbr.rel (%p390) target = $region40
        $region39: #{tpu_custom_call.1} parent=27 // pred_region
          %393 = dma.done [#allocation3], 32
        $region40: #{tpu_custom_call.1} parent=27 // pred_fallthru
          _
      $region28: #{tpu_custom_call.1} parent=5 // pred_fallthru
        _
      %p394 = scmp.le.s32.totalorder 2, %s9
      // Predicated region
      $region41: #{tpu_custom_call.1} parent=5 // pred_check
        %p395 = pneg %p394
      $region42: #{tpu_custom_call.1} parent=5 // pred_check_branch
        %397 = sbr.rel (%p395) target = $region44
      $region43: #{tpu_custom_call.1} parent=5 // pred_region
        %s398 = ssub.s32 %s9, 2
      $region44: #{tpu_custom_call.1} parent=5 // pred_fallthru
        _
    $region6: #{tpu_custom_call.1} parent=1 // loop_footer
      %s13 = sadd.s32 1, %s9
    $region7: #{tpu_custom_call.1} parent=1 // loop_footer_branch
      %8 = sbr.rel target = $region3
    $region8: #{tpu_custom_call.1} parent=1 // loop_exit
      _
    %399 = vsyncpa [#allocation3], 1
    %s400 = scalar_lea.sflag [#allocation3], 1
    %401 = vsyncpa %s400, 1

</llo_original>
